<compile_context>
chip_gen: v7x
topology: tpu7x:2x2x1
jax: 0.10.0
libtpu: 0.0.40
codegen_flags: <defaults>
</compile_context>

<pallas_src>
import math

import jax
import jax.numpy as jnp
from jax.experimental import pallas as pl
from jax.experimental.pallas import tpu as pltpu


def _round_up(x, m):
    return ((x + m - 1) // m) * m


def ffn_kernel(x_ref, gamma_ref, wi_ref, wo_ref, o_ref, acc_ref, normed_ref):
    k = pl.program_id(1)

    @pl.when(k == 0)
    def _():
        # T5 RMS LayerNorm in f32 (no mean subtraction, no bias), eps = 1e-6.
        xf = x_ref[...].astype(jnp.float32)                       # (tn, d_in)
        var = jnp.mean(xf * xf, axis=-1, keepdims=True)           # (tn, 1)
        normed = xf * jax.lax.rsqrt(var + 1e-6)
        normed = normed * gamma_ref[...].astype(jnp.float32)      # (1, d_in) scale
        normed_ref[...] = normed.astype(normed_ref.dtype)         # cached MXU feed
        acc_ref[...] = jnp.zeros_like(acc_ref)

    # h = gelu(normed @ wi[:, k-block])  -- MXU bf16 in, f32 accumulate;
    # elementwise gelu stays in f32 (v5e VPU/EUP have no bf16).
    h = jnp.dot(normed_ref[...], wi_ref[...], preferred_element_type=jnp.float32)
    h = 0.5 * h * (1.0 + jax.lax.erf(h * (1.0 / math.sqrt(2.0))))

    # acc += h @ wo[k-block, :]   (f32 accumulator in VMEM scratch)
    acc_ref[...] += jnp.dot(h.astype(wo_ref.dtype), wo_ref[...],
                            preferred_element_type=jnp.float32)

    @pl.when(k == pl.num_programs(1) - 1)
    def _():
        # Residual add in f32, then cast back to the input dtype.
        o_ref[...] = (x_ref[...].astype(jnp.float32) + acc_ref[...]).astype(o_ref.dtype)


def positionwise_ffn(x, gamma, wi_t, wo_t, *, compute_dtype=jnp.bfloat16,
                     tile_n=None, tile_k=None):
    """x: (..., d_in); gamma: (d_in,) or (1, d_in);
       wi_t: (d_in, d_hid); wo_t: (d_hid, d_in)."""
    orig_shape = x.shape
    d_in = orig_shape[-1]
    d_hid = wi_t.shape[1]

    x2d = x.reshape(-1, d_in)
    N = x2d.shape[0]
    gamma2d = gamma.reshape(1, d_in)

    # Weights fed to the MXU in compute_dtype (bf16 by default).
    wi_c = wi_t.astype(compute_dtype)
    wo_c = wo_t.astype(compute_dtype)

    # Token (row) tile: large for MXU occupancy, multiple of 8 sublanes.
    if tile_n is None:
        tile_n = 256 if N >= 256 else _round_up(N, 8)
    n_pad = _round_up(N, tile_n)
    if n_pad != N:
        # Zero-padded rows are harmless: rmsnorm(0)=0, gelu(0)=0, residual 0.
        x2d = jnp.pad(x2d, ((0, n_pad - N), (0, 0)))

    # Reduction tile over d_hid: bounds VMEM and streams wi/wo from HBM.
    if tile_k is None:
        if d_hid % 512 == 0:
            tile_k = 512
        elif d_hid % 256 == 0:
            tile_k = 256
        elif d_hid % 128 == 0:
            tile_k = 128
        else:
            tile_k = d_hid
    assert d_hid % tile_k == 0

    # Explicit VMEM budget (double-buffered io tiles + weight blocks + scratch),
    # clamped to v7x physical VMEM (64 MiB).
    x_bytes = x2d.dtype.itemsize
    w_bytes = jnp.dtype(compute_dtype).itemsize
    vmem_bytes = (
        2 * 2 * tile_n * d_in * x_bytes                         # x & out tiles
        + 2 * 2 * (d_in * tile_k + tile_k * d_in) * w_bytes     # wi & wo blocks
        + tile_n * d_in * (4 + w_bytes)                         # acc + normed scratch
    )
    vmem_limit = min(max(int(vmem_bytes * 1.5) + (4 << 20), 16 << 20), 64 << 20)

    out2d = pl.pallas_call(
        ffn_kernel,
        out_shape=jax.ShapeDtypeStruct((n_pad, d_in), x.dtype),
        grid_spec=pltpu.PrefetchScalarGridSpec(
            num_scalar_prefetch=0,
            grid=(n_pad // tile_n, d_hid // tile_k),
            in_specs=[
                pl.BlockSpec((tile_n, d_in), lambda i, k: (i, 0)),   # x tile
                pl.BlockSpec((1, d_in), lambda i, k: (0, 0)),        # gamma
                pl.BlockSpec((d_in, tile_k), lambda i, k: (0, k)),   # wi block
                pl.BlockSpec((tile_k, d_in), lambda i, k: (k, 0)),   # wo block
            ],
            out_specs=pl.BlockSpec((tile_n, d_in), lambda i, k: (i, 0)),
            scratch_shapes=[
                pltpu.VMEM((tile_n, d_in), jnp.float32),     # f32 accumulator
                pltpu.VMEM((tile_n, d_in), compute_dtype),   # cached normed x
            ],
        ),
        compiler_params=pltpu.CompilerParams(
            dimension_semantics=("parallel", "arbitrary"),
            vmem_limit_bytes=vmem_limit,
        ),
    )(x2d, gamma2d, wi_c, wo_c)

    return out2d[:N].reshape(orig_shape)


def reference_ffn(x, gamma, wi_t, wo_t):
    xf = x.astype(jnp.float32)
    var = jnp.mean(xf * xf, axis=-1, keepdims=True)
    normed = xf * jax.lax.rsqrt(var + 1e-6) * gamma.reshape(1, -1)
    h = normed @ wi_t
    h = 0.5 * h * (1.0 + jax.lax.erf(h / jnp.sqrt(2.0)))
    return xf + h @ wo_t


if __name__ == "__main__":
    # Small shapes consistent with the module: batch=2, seq=8, d_in=32, d_hid=64.
    batch, seq, d_in, d_hid = 2, 8, 32, 64

    key = jax.random.PRNGKey(0)
    kx, kwi, kwo = jax.random.split(key, 3)

    x = jax.random.normal(kx, (batch, seq, d_in), dtype=jnp.float32)

    # Deterministic param init mirroring the PyTorch __init__:
    #   wi.weight ~ N(0, d_in^-0.5)  shape (d_hid, d_in) -> transpose to (d_in, d_hid)
    #   wo.weight ~ N(0, d_hid^-0.5) shape (d_in, d_hid) -> transpose to (d_hid, d_in)
    #   layer_norm.weight = ones(d_in)
    wi_weight = jax.random.normal(kwi, (d_hid, d_in), dtype=jnp.float32) * (d_in ** -0.5)
    wo_weight = jax.random.normal(kwo, (d_in, d_hid), dtype=jnp.float32) * (d_hid ** -0.5)
    gamma = jnp.ones((d_in,), dtype=jnp.float32)

    wi_t = wi_weight.T   # (d_in, d_hid)
    wo_t = wo_weight.T   # (d_hid, d_in)

    x2d = x.reshape(batch * seq, d_in)
    ref = reference_ffn(x2d, gamma, wi_t, wo_t).reshape(batch, seq, d_in)

    # 1) Default (performance) path: bf16 MXU operands, f32 accumulation.
    out_bf16 = positionwise_ffn(x, gamma, wi_t, wo_t, compute_dtype=jnp.bfloat16)
    jax.block_until_ready(out_bf16)
    assert jnp.allclose(out_bf16, ref, atol=5e-2, rtol=5e-2), "bf16 path mismatch vs reference"

    # 2) Full-precision sanity check path.
    out_f32 = positionwise_ffn(x, gamma, wi_t, wo_t, compute_dtype=jnp.float32)
    jax.block_until_ready(out_f32)
    assert jnp.allclose(out_f32, ref, atol=1e-5, rtol=1e-5), "f32 path mismatch vs reference"

    print("KERNEL_OK")
</pallas_src>

<mosaic_0001>
module attributes {stable_mosaic.version = 11 : i64} {
  func.func @ffn_kernel(%arg0: i32, %arg1: i32, %arg2: memref<16x32xf32, #tpu.memory_space<vmem>>, %arg3: memref<1x32xf32, #tpu.memory_space<vmem>>, %arg4: memref<32x64xbf16, #tpu.memory_space<vmem>>, %arg5: memref<64x32xbf16, #tpu.memory_space<vmem>>, %arg6: memref<16x32xf32, #tpu.memory_space<vmem>>, %arg7: memref<16x32xf32, #tpu.memory_space<vmem>>, %arg8: memref<16x32xbf16, #tpu.memory_space<vmem>>) attributes {dimension_semantics = [#tpu.dimension_semantics<parallel>, #tpu.dimension_semantics<arbitrary>], iteration_bounds = array<i64: 1, 1>, scalar_prefetch = 0 : i64, scratch_operands = 2 : i64, tpu.core_type = #tpu.core_type<tc>, window_params = [{transform_indices = @transform_0, window_bounds = array<i64: 16, 32>}, {pipeline_mode = #tpu.pipeline_mode<synchronous>, transform_indices = @transform_1, window_bounds = array<i64: 1, 32>}, {transform_indices = @transform_2, window_bounds = array<i64: 32, 64>}, {transform_indices = @transform_3, window_bounds = array<i64: 64, 32>}, {transform_indices = @transform_4, window_bounds = array<i64: 16, 32>}]} {
    %c0_i32 = arith.constant 0 : i32
    %0 = arith.cmpi eq, %arg1, %c0_i32 : i32
    %1 = arith.extui %0 : i1 to i32
    %c0_i32_0 = arith.constant 0 : i32
    %2 = arith.cmpi ne, %1, %c0_i32_0 : i32
    scf.if %2 {
      %c0_16 = arith.constant 0 : index
      %c0_17 = arith.constant 0 : index
      %23 = vector.load %arg2[%c0_16, %c0_17] : memref<16x32xf32, #tpu.memory_space<vmem>>, vector<16x32xf32>
      %24 = arith.mulf %23, %23 : vector<16x32xf32>
      %cst_18 = arith.constant dense<0.000000e+00> : vector<16xf32>
      %25 = vector.multi_reduction <add>, %24, %cst_18 [1] : vector<16x32xf32> to vector<16xf32>
      %26 = vector.shape_cast %25 : vector<16xf32> to vector<16x1xf32>
      %cst_19 = arith.constant 3.200000e+01 : f32
      %27 = vector.broadcast %cst_19 : f32 to vector<16x1xf32>
      %28 = arith.divf %26, %27 : vector<16x1xf32>
      %cst_20 = arith.constant 9.99999997E-7 : f32
      %29 = vector.broadcast %cst_20 : f32 to vector<16x1xf32>
      %30 = arith.addf %28, %29 : vector<16x1xf32>
      %31 = math.rsqrt %30 : vector<16x1xf32>
      %32 = vector.broadcast %31 : vector<16x1xf32> to vector<16x32xf32>
      %33 = arith.mulf %23, %32 : vector<16x32xf32>
      %c0_21 = arith.constant 0 : index
      %c0_22 = arith.constant 0 : index
      %34 = vector.load %arg3[%c0_21, %c0_22] : memref<1x32xf32, #tpu.memory_space<vmem>>, vector<1x32xf32>
      %35 = vector.broadcast %34 : vector<1x32xf32> to vector<16x32xf32>
      %36 = arith.mulf %33, %35 : vector<16x32xf32>
      %37 = arith.truncf %36 : vector<16x32xf32> to vector<16x32xbf16>
      %c0_23 = arith.constant 0 : index
      %c0_24 = arith.constant 0 : index
      %38 = vector.load %arg8[%c0_23, %c0_24] : memref<16x32xbf16, #tpu.memory_space<vmem>>, vector<16x32xbf16>
      tpu.vector_store %arg8[%c0_23, %c0_24], %37 {strides = array<i32>} : memref<16x32xbf16, #tpu.memory_space<vmem>>, vector<16x32xbf16>,
      %cst_25 = arith.constant 0.000000e+00 : f32
      %39 = vector.broadcast %cst_25 : f32 to vector<16x32xf32>
      %c0_26 = arith.constant 0 : index
      %c0_27 = arith.constant 0 : index
      %40 = vector.load %arg7[%c0_26, %c0_27] : memref<16x32xf32, #tpu.memory_space<vmem>>, vector<16x32xf32>
      tpu.vector_store %arg7[%c0_26, %c0_27], %39 {strides = array<i32>} : memref<16x32xf32, #tpu.memory_space<vmem>>, vector<16x32xf32>,
    } else {
    }
    %c0 = arith.constant 0 : index
    %c0_1 = arith.constant 0 : index
    %3 = vector.load %arg8[%c0, %c0_1] : memref<16x32xbf16, #tpu.memory_space<vmem>>, vector<16x32xbf16>
    %c0_2 = arith.constant 0 : index
    %c0_3 = arith.constant 0 : index
    %4 = vector.load %arg4[%c0_2, %c0_3] : memref<32x64xbf16, #tpu.memory_space<vmem>>, vector<32x64xbf16>
    %cst = arith.constant dense<0.000000e+00> : vector<16x64xf32>
    %5 = tpu.matmul %3, %4, %cst {dimension_numbers = #tpu.dot_dimension_numbers<[1], [0], [0], [1], [0, 0, 1, 1], [], []>} : vector<16x32xbf16>, vector<32x64xbf16>, vector<16x64xf32> -> vector<16x64xf32>
    %cst_4 = arith.constant 5.000000e-01 : f32
    %6 = vector.broadcast %cst_4 : f32 to vector<16x64xf32>
    %7 = arith.mulf %6, %5 : vector<16x64xf32>
    %cst_5 = arith.constant 0.707106769 : f32
    %8 = vector.broadcast %cst_5 : f32 to vector<16x64xf32>
    %9 = arith.mulf %5, %8 : vector<16x64xf32>
    %10 = math.erf %9 : vector<16x64xf32>
    %cst_6 = arith.constant 1.000000e+00 : f32
    %11 = vector.broadcast %cst_6 : f32 to vector<16x64xf32>
    %12 = arith.addf %11, %10 : vector<16x64xf32>
    %13 = arith.mulf %7, %12 : vector<16x64xf32>
    %c0_7 = arith.constant 0 : index
    %c0_8 = arith.constant 0 : index
    %14 = vector.load %arg7[%c0_7, %c0_8] : memref<16x32xf32, #tpu.memory_space<vmem>>, vector<16x32xf32>
    %15 = arith.truncf %13 : vector<16x64xf32> to vector<16x64xbf16>
    %c0_9 = arith.constant 0 : index
    %c0_10 = arith.constant 0 : index
    %16 = vector.load %arg5[%c0_9, %c0_10] : memref<64x32xbf16, #tpu.memory_space<vmem>>, vector<64x32xbf16>
    %cst_11 = arith.constant dense<0.000000e+00> : vector<16x32xf32>
    %17 = tpu.matmul %15, %16, %cst_11 {dimension_numbers = #tpu.dot_dimension_numbers<[1], [0], [0], [1], [0, 0, 1, 1], [], []>} : vector<16x64xbf16>, vector<64x32xbf16>, vector<16x32xf32> -> vector<16x32xf32>
    %18 = arith.addf %14, %17 : vector<16x32xf32>
    %c0_12 = arith.constant 0 : index
    %c0_13 = arith.constant 0 : index
    %19 = vector.load %arg7[%c0_12, %c0_13] : memref<16x32xf32, #tpu.memory_space<vmem>>, vector<16x32xf32>
    tpu.vector_store %arg7[%c0_12, %c0_13], %18 {strides = array<i32>} : memref<16x32xf32, #tpu.memory_space<vmem>>, vector<16x32xf32>,
    %c0_i32_14 = arith.constant 0 : i32
    %20 = arith.cmpi eq, %arg1, %c0_i32_14 : i32
    %21 = arith.extui %20 : i1 to i32
    %c0_i32_15 = arith.constant 0 : i32
    %22 = arith.cmpi ne, %21, %c0_i32_15 : i32
    scf.if %22 {
      %c0_16 = arith.constant 0 : index
      %c0_17 = arith.constant 0 : index
      %23 = vector.load %arg2[%c0_16, %c0_17] : memref<16x32xf32, #tpu.memory_space<vmem>>, vector<16x32xf32>
      %c0_18 = arith.constant 0 : index
      %c0_19 = arith.constant 0 : index
      %24 = vector.load %arg7[%c0_18, %c0_19] : memref<16x32xf32, #tpu.memory_space<vmem>>, vector<16x32xf32>
      %25 = arith.addf %23, %24 : vector<16x32xf32>
      %c0_20 = arith.constant 0 : index
      %c0_21 = arith.constant 0 : index
      %26 = vector.load %arg6[%c0_20, %c0_21] : memref<16x32xf32, #tpu.memory_space<vmem>>, vector<16x32xf32>
      tpu.vector_store %arg6[%c0_20, %c0_21], %25 {strides = array<i32>} : memref<16x32xf32, #tpu.memory_space<vmem>>, vector<16x32xf32>,
    } else {
    }
    return
  }
  func.func @transform_0(%arg0: i32, %arg1: i32) -> (i32, i32) {
    %c0_i32 = arith.constant 0 : i32
    %c0_i32_0 = arith.constant 0 : i32
    return %arg0, %c0_i32 : i32, i32
  }
  func.func @transform_1(%arg0: i32, %arg1: i32) -> (i32, i32) {
    %c0_i32 = arith.constant 0 : i32
    %c0_i32_0 = arith.constant 0 : i32
    %c0_i32_1 = arith.constant 0 : i32
    return %c0_i32, %c0_i32_0 : i32, i32
  }
  func.func @transform_2(%arg0: i32, %arg1: i32) -> (i32, i32) {
    %c0_i32 = arith.constant 0 : i32
    %c0_i32_0 = arith.constant 0 : i32
    return %c0_i32, %arg1 : i32, i32
  }
  func.func @transform_3(%arg0: i32, %arg1: i32) -> (i32, i32) {
    %c0_i32 = arith.constant 0 : i32
    %c0_i32_0 = arith.constant 0 : i32
    return %arg1, %c0_i32 : i32, i32
  }
  func.func @transform_4(%arg0: i32, %arg1: i32) -> (i32, i32) {
    %c0_i32 = arith.constant 0 : i32
    %c0_i32_0 = arith.constant 0 : i32
    return %arg0, %c0_i32 : i32, i32
  }
}

</mosaic_0001>

<llo_original>
// kernel: tpu_custom_call.1
$region0: #{tpu_custom_call.1}
  #allocation0 [shape = 'u32[]', space=smem, size = 0x4, offset = 0x4, fixed_abs, tag = 'smem constant byte address 0x4 - core index']
  #allocation1 [shape = 'u32[144,128]{1,0:T(1,128)}', space=vmem, size = 0x12000, scoped, tag = 'internal scratch']
  #allocation2 [shape = 'f32[16,32]{1,0:T(8,128)}', space=vmem, size = 0x2000, scoped, tag = 'scratch operand']
  #allocation3 [shape = 'bf16[16,32]{1,0:T(16,128)(2,1)}', space=vmem, size = 0x1000, scoped, tag = 'scratch operand']
  %s0 = inlined_call_operand.vmem [shape: f32[16,32], index: 0, kind: input, shape index: {}]
  %s1 = inlined_call_operand.vmem [shape: f32[1,32], index: 1, kind: input, shape index: {}]
  %s2 = inlined_call_operand.vmem [shape: bf16[32,64], index: 2, kind: input, shape index: {}]
  %s3 = inlined_call_operand.vmem [shape: bf16[64,32], index: 3, kind: input, shape index: {}]
  %s4 = inlined_call_operand.hbm [shape: f32[16,32], index: 4, kind: output, shape index: {}]
  %s5 = sld [smem:[#allocation0]]
  $region34: #{tpu_custom_call.1} parent=0
    _
  %s7 = ssub.s32 1, %s5
  %s8 = scalar_select 0, %s7, %s5
  $region1: #{tpu_custom_call.1} parent=0
    #allocation4 [shape = 'u8[8192]{0}', space=vmem, size = 0x2000, scoped, tag = 'output window, operand 0, single buffered']
    #allocation5 [shape = 's32[1]{0}', space=sflag, size = 0x4, scoped, tag = 'scoped memory for tpu_custom_call.1']
    %9 = vsyncpa [#allocation5], 0
    // Predicated region
    $region2: #{tpu_custom_call.1} parent=1 // pred_check
      _
    $region3: #{tpu_custom_call.1} parent=1 // pred_check_branch
      %11 = sbr.rel (0) target = $region5
    $region4: #{tpu_custom_call.1} parent=1 // pred_region
      _
    $region5: #{tpu_custom_call.1} parent=1 // pred_fallthru
      _
    // Predicated region
    $region6: #{tpu_custom_call.1} parent=1 // pred_check
      _
    $region7: #{tpu_custom_call.1} parent=1 // pred_check_branch
      %13 = sbr.rel (0) target = $region9
    $region8: #{tpu_custom_call.1} parent=1 // pred_region
      _
    $region9: #{tpu_custom_call.1} parent=1 // pred_fallthru
      _
    // Predicated region
    $region10: #{tpu_custom_call.1} parent=1 // pred_check
      _
    $region11: #{tpu_custom_call.1} parent=1 // pred_check_branch
      %15 = sbr.rel (0) target = $region13
    $region12: #{tpu_custom_call.1} parent=1 // pred_region
      _
    $region13: #{tpu_custom_call.1} parent=1 // pred_fallthru
      _
    // Predicated region
    $region14: #{tpu_custom_call.1} parent=1 // pred_check
      _
    $region15: #{tpu_custom_call.1} parent=1 // pred_check_branch
      %17 = sbr.rel (0) target = $region17
    $region16: #{tpu_custom_call.1} parent=1 // pred_region
      _
    $region17: #{tpu_custom_call.1} parent=1 // pred_fallthru
      _
    %p19 = scmp.eq.s32.totalorder 0, 0
    // Predicated region
    $region18: #{tpu_custom_call.1} parent=1 // pred_check
      %p20 = pneg %p19
    $region19: #{tpu_custom_call.1} parent=1 // pred_check_branch
      %22 = sbr.rel (%p20) target = $region21
    $region20: #{tpu_custom_call.1} parent=1 // pred_region
      %v23 = vld [vmem:[%s0] sm:$0xff]
      %v24 = vld [vmem:[%s0 + $0x8] sm:$0xff]
      %v25 = vmul.f32 %v23, %v23
      %v26 = vmul.f32 %v24, %v24
      %vm27 = vcmask 261120
      %v28 = vsel %vm27, %v25, 0.0
      %29 = vadd.xlane.f32.xlu0 %v28
      %v30 = vpop.xlane.xlu0 %29
      %v31 = vsel %vm27, %v26, 0.0
      %32 = vadd.xlane.f32.xlu0 %v31
      %v33 = vpop.xlane.xlu0 %32
      %v34 = vrcp.pop 32.0
      %v35 = vmul.f32 %v30, %v34
      %v36 = vmul.f32 %v33, %v34
      %v37 = vadd.f32 %v35, 1e-06
      %v38 = vadd.f32 %v36, 1e-06
      %v39 = vrsqrt.pop %v37
      %v40 = vrsqrt.pop %v38
      %v41 = vmul.f32 %v23, %v39
      %v42 = vmul.f32 %v24, %v40
      %v43 = vld [vmem:[%s1] sm:$0x1]
      %v45 = vlaneseq
      %v46 = vshrl.u32 %v45, 7
      %v47 = vsub.s32 0, %v46
      %v48 = vrot.slane %v43, %v47
      %v50 = vmul.f32 %v41, %v48
      %v51 = vmul.f32 %v42, %v48
      %v52 = vpack.c.bf16 %v51, %v50
      %53 = vst.msk [vmem:[#allocation3] sm:$0xff] %vm27, %v52
      %54 = vst.msk [vmem:[#allocation2] sm:$0xff] %vm27, 0.0
      %55 = vst.msk [vmem:[#allocation2 + $0x8] sm:$0xff] %vm27, 0.0
    $region21: #{tpu_custom_call.1} parent=1 // pred_fallthru
      _
    %v56 = vld [vmem:[#allocation3] sm:$0xff]
    %v57 = vld [vmem:[%s2] sm:$0xf]
    %v58 = vld [vmem:[%s2 + $0x4] sm:$0xf]
    %v59 = vld [vmem:[%s2 + $0x8] sm:$0xf]
    %v60 = vld [vmem:[%s2 + $0xc] sm:$0xf]
    %v65 = vunpack.c.l.b16 %v57
    %v66 = vunpack.c.l.b16 %v58
    %v67 = vunpack.c.l.b16 %v59
    %v68 = vunpack.c.l.b16 %v60
    %v69 = vpack.c.b16 %v66, %v65
    %v70 = vpack.c.b16 %v68, %v67
    %vm73 = vcmask 261120
    %v75 = vsel %vm73, %v56, 0
    %77 = vmatprep.subr.bf16.mxu0 0
    %78 = vmatpush1.bf16.msra.mxu0 %v69
    %79 = vmatprep.subr.bf16.mxu0 0
    %80 = vmatpush1.bf16.msra.mxu0 %v70
    %81 = vmatprep.subr.bf16.mxu0 0
    %82 = vmatpush1.bf16.msra.mxu0 0
    %83 = vmatprep.subr.bf16.mxu0 0
    %84 = vmatpush1.bf16.msra.mxu0 0
    %85 = vmatprep.subr.bf16.mxu0 0
    %86 = vmatpush1.bf16.msra.mxu0 0
    %87 = vmatprep.subr.bf16.mxu0 0
    %88 = vmatpush1.bf16.msra.mxu0 0
    %89 = vmatprep.subr.bf16.mxu0 0
    %90 = vmatpush1.bf16.msra.mxu0 0
    %91 = vmatprep.subr.bf16.mxu0 0
    %92 = vmatpush1.bf16.msra.mxu0 0
    %93 = vmatprep.subr.bf16.mxu0 0
    %94 = vmatpush1.bf16.msra.mxu0 0
    %95 = vmatprep.subr.bf16.mxu0 0
    %96 = vmatpush1.bf16.msra.mxu0 0
    %97 = vmatprep.subr.bf16.mxu0 0
    %98 = vmatpush1.bf16.msra.mxu0 0
    %99 = vmatprep.subr.bf16.mxu0 0
    %100 = vmatpush1.bf16.msra.mxu0 0
    %101 = vmatprep.subr.bf16.mxu0 0
    %102 = vmatpush1.bf16.msra.mxu0 0
    %103 = vmatprep.subr.bf16.mxu0 0
    %104 = vmatpush1.bf16.msra.mxu0 0
    %105 = vmatprep.subr.bf16.mxu0 0
    %106 = vmatpush1.bf16.msra.mxu0 0
    %107 = vmatprep.subr.bf16.mxu0 0
    %108 = vmatpush1.bf16.msra.mxu0 0
    %109 = vmatprep.mubr.bf16.mxu0 0
    %110 = vmatmul.mubr.bf16.gmra.mrb[0].mxu0 %v75
    %v111 = vpop.f32.mrb[0].mxu0
    %v112 = vadd.f32 0.0, %v111
    %v113 = vpop.f32.mrb[0].mxu0
    %v114 = vpop.f32.mrb[0].mxu0
    %v115 = vadd.f32 0.0, %v114
    %v116 = vpop.f32.mrb[0].mxu0
    %117 = vdwg.mxu0
    %v118 = vmul.f32 %v112, 0.5
    %v119 = vmul.f32 %v115, 0.5
    %v120 = vmul.f32 %v112, 0.70710677
    %v121 = vmul.f32 %v115, 0.70710677
    %v122 = verf.f32.pop %v120
    %v123 = verf.f32.pop %v121
    %v124 = vadd.f32 %v122, 1.0
    %v125 = vadd.f32 %v123, 1.0
    %v126 = vmul.f32 %v118, %v124
    %v127 = vmul.f32 %v119, %v125
    %v128 = vld [vmem:[#allocation2] sm:$0xff]
    %v129 = vld [vmem:[#allocation2 + $0x8] sm:$0xff]
    %v130 = vpack.c.bf16 %v127, %v126
    %v131 = vld [vmem:[%s3] sm:$0xf]
    %v132 = vld [vmem:[%s3 + $0x4] sm:$0xf]
    %v133 = vld [vmem:[%s3 + $0x8] sm:$0xf]
    %v134 = vld [vmem:[%s3 + $0xc] sm:$0xf]
    %v135 = vld [vmem:[%s3 + $0x10] sm:$0xf]
    %v136 = vld [vmem:[%s3 + $0x14] sm:$0xf]
    %v137 = vld [vmem:[%s3 + $0x18] sm:$0xf]
    %v138 = vld [vmem:[%s3 + $0x1c] sm:$0xf]
    %v147 = vunpack.c.l.b16 %v131
    %v148 = vunpack.c.l.b16 %v132
    %v149 = vunpack.c.l.b16 %v133
    %v150 = vunpack.c.l.b16 %v134
    %v151 = vunpack.c.l.b16 %v135
    %v152 = vunpack.c.l.b16 %v136
    %v153 = vunpack.c.l.b16 %v137
    %v154 = vunpack.c.l.b16 %v138
    %v155 = vpack.c.b16 %v148, %v147
    %v156 = vpack.c.b16 %v150, %v149
    %v157 = vpack.c.b16 %v152, %v151
    %v158 = vpack.c.b16 %v154, %v153
    %vm163 = vcmask 523264
    %v165 = vsel %vm163, %v130, 0
    %167 = vmatprep.subr.bf16.mxu0 0
    %168 = vmatpush1.bf16.msra.mxu0 %v155
    %169 = vmatprep.subr.bf16.mxu0 0
    %170 = vmatpush1.bf16.msra.mxu0 %v156
    %171 = vmatprep.subr.bf16.mxu0 0
    %172 = vmatpush1.bf16.msra.mxu0 %v157
    %173 = vmatprep.subr.bf16.mxu0 0
    %174 = vmatpush1.bf16.msra.mxu0 %v158
    %175 = vmatprep.subr.bf16.mxu0 0
    %176 = vmatpush1.bf16.msra.mxu0 0
    %177 = vmatprep.subr.bf16.mxu0 0
    %178 = vmatpush1.bf16.msra.mxu0 0
    %179 = vmatprep.subr.bf16.mxu0 0
    %180 = vmatpush1.bf16.msra.mxu0 0
    %181 = vmatprep.subr.bf16.mxu0 0
    %182 = vmatpush1.bf16.msra.mxu0 0
    %183 = vmatprep.subr.bf16.mxu0 0
    %184 = vmatpush1.bf16.msra.mxu0 0
    %185 = vmatprep.subr.bf16.mxu0 0
    %186 = vmatpush1.bf16.msra.mxu0 0
    %187 = vmatprep.subr.bf16.mxu0 0
    %188 = vmatpush1.bf16.msra.mxu0 0
    %189 = vmatprep.subr.bf16.mxu0 0
    %190 = vmatpush1.bf16.msra.mxu0 0
    %191 = vmatprep.subr.bf16.mxu0 0
    %192 = vmatpush1.bf16.msra.mxu0 0
    %193 = vmatprep.subr.bf16.mxu0 0
    %194 = vmatpush1.bf16.msra.mxu0 0
    %195 = vmatprep.subr.bf16.mxu0 0
    %196 = vmatpush1.bf16.msra.mxu0 0
    %197 = vmatprep.subr.bf16.mxu0 0
    %198 = vmatpush1.bf16.msra.mxu0 0
    %199 = vmatprep.mubr.bf16.mxu0 0
    %200 = vmatmul.mubr.bf16.gmra.mrb[0].mxu0 %v165
    %v201 = vpop.f32.mrb[0].mxu0
    %v202 = vadd.f32 0.0, %v201
    %v203 = vpop.f32.mrb[0].mxu0
    %v204 = vpop.f32.mrb[0].mxu0
    %v205 = vadd.f32 0.0, %v204
    %v206 = vpop.f32.mrb[0].mxu0
    %207 = vdwg.mxu0
    %v208 = vadd.f32 %v128, %v202
    %v209 = vadd.f32 %v129, %v205
    %210 = vst.msk [vmem:[#allocation2] sm:$0xff] %vm73, %v208
    %211 = vst.msk [vmem:[#allocation2 + $0x8] sm:$0xff] %vm73, %v209
    // Predicated region
    $region22: #{tpu_custom_call.1} parent=1 // pred_check
      %p212 = pneg %p19
    $region23: #{tpu_custom_call.1} parent=1 // pred_check_branch
      %214 = sbr.rel (%p212) target = $region25
    $region24: #{tpu_custom_call.1} parent=1 // pred_region
      %v215 = vld [vmem:[%s0] sm:$0xff]
      %v216 = vld [vmem:[%s0 + $0x8] sm:$0xff]
      %v217 = vld [vmem:[#allocation2] sm:$0xff]
      %v218 = vld [vmem:[#allocation2 + $0x8] sm:$0xff]
      %v219 = vadd.f32 %v215, %v217
      %v220 = vadd.f32 %v216, %v218
      %221 = vst.msk [vmem:[#allocation4] sm:$0xff] %vm73, %v219
      %222 = vst.msk [vmem:[#allocation4 + $0x8] sm:$0xff] %vm73, %v220
    $region25: #{tpu_custom_call.1} parent=1 // pred_fallthru
      _
    // Predicated region
    $region26: #{tpu_custom_call.1} parent=1 // pred_check
      _
    $region27: #{tpu_custom_call.1} parent=1 // pred_check_branch
      %224 = sbr.rel (0) target = $region29
    $region28: #{tpu_custom_call.1} parent=1 // pred_region
      %s226 = ssub.s32 256, 256
      %227 = vsyncadd [#allocation5], %s226
      %s228 = sshll.u32 [#allocation4], 4
      %s229 = int_to_ptr.vmem [resolvable:$true] %s228
      %234 = dma.vmem_to_hbm [thread:$0]  %s229, 256, %s4, [#allocation5], 128, 128, 8
    $region29: #{tpu_custom_call.1} parent=1 // pred_fallthru
      _
    // Predicated region
    $region30: #{tpu_custom_call.1} parent=1 // pred_check
      _
    $region31: #{tpu_custom_call.1} parent=1 // pred_check_branch
      %236 = sbr.rel (0) target = $region33
    $region32: #{tpu_custom_call.1} parent=1 // pred_region
      %237 = dma.done [#allocation5], 256
    $region33: #{tpu_custom_call.1} parent=1 // pred_fallthru
      _
    %238 = vsyncpa [#allocation5], 1

</llo_original>
